<compile_context>
chip_gen: v5e
topology: v5e:2x2
jax: 0.10.0
libtpu: 0.0.40
codegen_flags: <defaults>
</compile_context>

<pallas_src>
import functools

import jax
import jax.numpy as jnp
from jax.experimental import pallas as pl
from jax.experimental.pallas import tpu as pltpu


def _cqr_kernel(preds_ref, target_ref, out_ref, *, quantiles, tile_rows,
                valid_rows, need_mask):
    """Per-tile pinball-loss partial sum.

    preds_ref : (Q, tile_rows, 128) VMEM  quantile predictions, dense layout
    target_ref: (tile_rows, 128)    VMEM  targets
    out_ref   : (1, 8, 128)         VMEM  dense per-tile partial sum
    """
    target = target_ref[...].astype(jnp.float32)            # (tr, 128)
    acc = jnp.zeros_like(target)                             # f32 accumulator
    for i, q in enumerate(quantiles):                        # Q is tiny/static
        e = target - preds_ref[i].astype(jnp.float32)        # (tr, 128)
        acc = acc + jnp.maximum(q * e, (q - 1.0) * e)        # pinball loss

    if need_mask:
        # Last grid tile may extend past the array: mask rows >= valid_rows.
        row = jax.lax.broadcasted_iota(jnp.int32, acc.shape, 0)
        grow = pl.program_id(0) * tile_rows + row
        acc = jnp.where(grow < valid_rows, acc, 0.0)

    # Reduce (tile_rows, 128) -> (8, 128) with pure elementwise vreg adds
    # (leading-dim split aligns with the (8,128) vreg tiling; no XLU needed).
    out_ref[...] = jnp.sum(acc.reshape(tile_rows // 8, 8, 128), axis=0)[None]


@functools.partial(jax.jit, static_argnames=("quantiles", "tile_n"))
def cqr_loss(preds, target, quantiles, tile_n=512 * 1024):
    """preds: (N, Q), target: (N,) or (N, 1); quantiles: static tuple of floats."""
    if target.ndim == 2:
        target = target.reshape(-1)
    n, nq = preds.shape
    assert nq == len(quantiles)
    assert target.shape[0] == n

    # Round N up to a multiple of 1024 (= 8 rows x 128 lanes) so the dense
    # reshape below is a pure bitcast and the row count is a multiple of 8.
    # Zero-padded samples give errors == 0 -> pinball == 0, so they are free.
    rows = pl.cdiv(n, 1024) * 8              # 128-lane rows after padding
    npad = rows * 128
    if npad != n:
        preds = jnp.pad(preds, ((0, npad - n), (0, 0)))
        target = jnp.pad(target, ((0, npad - n),))

    # Single relayout pass over preds (pad+transpose fuse; reshape is a
    # bitcast). target's reshape is free.  Keep the native dtype (bf16 ok).
    preds_r = jnp.transpose(preds).reshape(nq, rows, 128)    # (Q, rows, 128)
    target_r = jnp.reshape(target, (rows, 128))              # (rows, 128)

    # Tile sizing: big enough to amortize the ~0.35us/step overhead, clamped
    # so double-buffered VMEM stays under a v7x-safe cap.
    dsize = preds.dtype.itemsize
    cap = 48 * 1024 * 1024                   # safe vs v7x 64 MiB physical VMEM
    margin = 4 * 1024 * 1024
    per_row_2buf = (nq + 1) * 128 * dsize * 2   # preds + target, double-buffered
    max_rows = max(8, ((cap - margin) // per_row_2buf) // 8 * 8)
    tile_rows = max(8, (tile_n // 128) // 8 * 8)
    tile_rows = min(tile_rows, max_rows, rows)
    num_tiles = pl.cdiv(rows, tile_rows)
    need_mask = (num_tiles * tile_rows != rows)
    vmem_limit = int(min(max(per_row_2buf * tile_rows + margin,
                             32 * 1024 * 1024), cap))

    kernel = functools.partial(
        _cqr_kernel,
        quantiles=tuple(float(q) for q in quantiles),
        tile_rows=tile_rows,
        valid_rows=rows,
        need_mask=need_mask,
    )

    partial_sums = pl.pallas_call(
        kernel,
        out_shape=jax.ShapeDtypeStruct((num_tiles, 8, 128), jnp.float32),
        grid=(num_tiles,),
        in_specs=[
            pl.BlockSpec((nq, tile_rows, 128), lambda i: (0, i, 0)),  # preds
            pl.BlockSpec((tile_rows, 128), lambda i: (i, 0)),         # target
        ],
        out_specs=pl.BlockSpec((1, 8, 128), lambda i: (i, 0, 0)),
        compiler_params=pltpu.CompilerParams(
            dimension_semantics=("parallel",),   # shard grid across TCs (v7x)
            vmem_limit_bytes=vmem_limit,
        ),
    )(preds_r, target_r)

    # Tiny final reduce; divide by the TRUE N (not the padded N).
    return jnp.sum(partial_sums) * (1.0 / n)


def cqr_loss_ref(preds, target, quantiles):
    """Pure-JAX reference mirroring the PyTorch forward (reduction='mean')."""
    losses = []
    for i, q in enumerate(quantiles):
        errors = target - preds[..., i]
        losses.append(jnp.maximum((q - 1.0) * errors, q * errors)[:, None])
    loss = jnp.sum(jnp.concatenate(losses, axis=1), axis=1)
    return jnp.mean(loss)


if __name__ == "__main__":
    quantiles = (0.1, 0.5, 0.9)
    Q = len(quantiles)

    # Small example (single tile, fully padded tail).
    N = 8
    kp, kt = jax.random.split(jax.random.PRNGKey(0))
    preds = jax.random.normal(kp, (N, Q), dtype=jnp.float32)
    target = jax.random.normal(kt, (N,), dtype=jnp.float32)
    out = jax.block_until_ready(cqr_loss(preds, target, quantiles=quantiles))
    ref = cqr_loss_ref(preds, target, quantiles)
    assert jnp.allclose(out, ref, atol=1e-5, rtol=1e-5), (out, ref)

    # Multi-tile path + masked (partially out-of-bounds) last tile + N that is
    # not a multiple of 128.
    N2 = 3000
    kp2, kt2 = jax.random.split(jax.random.PRNGKey(1))
    preds2 = jax.random.normal(kp2, (N2, Q), dtype=jnp.float32)
    target2 = jax.random.normal(kt2, (N2,), dtype=jnp.float32)
    out2 = jax.block_until_ready(
        cqr_loss(preds2, target2, quantiles=quantiles, tile_n=2048))
    ref2 = cqr_loss_ref(preds2, target2, quantiles)
    assert jnp.allclose(out2, ref2, atol=1e-5, rtol=1e-5), (out2, ref2)

    # bf16 end-to-end (halves HBM bytes); accumulation stays in f32.
    preds3 = preds2.astype(jnp.bfloat16)
    target3 = target2.astype(jnp.bfloat16)
    out3 = jax.block_until_ready(
        cqr_loss(preds3, target3, quantiles=quantiles, tile_n=2048))
    ref3 = cqr_loss_ref(preds3.astype(jnp.float32),
                        target3.astype(jnp.float32), quantiles)
    assert jnp.allclose(out3, ref3, atol=1e-3, rtol=1e-3), (out3, ref3)

    # TODO(synk): calibrate/predict/apply_inverse/calc_nc_error are offline
    # NumPy conformal-calibration helpers (sorting/indexing), not part of the
    # forward pass; not ported to Pallas.
    print("KERNEL_OK")
</pallas_src>

<mosaic_0001>
module attributes {stable_mosaic.version = 11 : i64} {
  func.func @_cqr_kernel(%arg0: i32, %arg1: memref<3x8x128xf32, #tpu.memory_space<vmem>>, %arg2: memref<8x128xf32, #tpu.memory_space<vmem>>, %arg3: memref<1x8x128xf32, #tpu.memory_space<vmem>>) attributes {dimension_semantics = [#tpu.dimension_semantics<parallel>], iteration_bounds = array<i64: 1>, scalar_prefetch = 0 : i64, scratch_operands = 0 : i64, tpu.core_type = #tpu.core_type<tc>, window_params = [{transform_indices = @transform_0, window_bounds = array<i64: 3, 8, 128>}, {transform_indices = @transform_1, window_bounds = array<i64: 8, 128>}, {transform_indices = @transform_2, window_bounds = array<i64: 1, 8, 128>}]} {
    %c0 = arith.constant 0 : index
    %c0_0 = arith.constant 0 : index
    %0 = vector.load %arg2[%c0, %c0_0] : memref<8x128xf32, #tpu.memory_space<vmem>>, vector<8x128xf32>
    %cst = arith.constant 0.000000e+00 : f32
    %1 = vector.broadcast %cst : f32 to vector<8x128xf32>
    %c0_1 = arith.constant 0 : index
    %c0_2 = arith.constant 0 : index
    %c0_3 = arith.constant 0 : index
    %2 = vector.load %arg1[%c0_1, %c0_2, %c0_3] : memref<3x8x128xf32, #tpu.memory_space<vmem>>, vector<1x8x128xf32>
    %3 = vector.shape_cast %2 : vector<1x8x128xf32> to vector<8x128xf32>
    %4 = arith.subf %0, %3 : vector<8x128xf32>
    %cst_4 = arith.constant 1.000000e-01 : f32
    %5 = vector.broadcast %cst_4 : f32 to vector<8x128xf32>
    %6 = arith.mulf %5, %4 : vector<8x128xf32>
    %cst_5 = arith.constant -0.899999976 : f32
    %7 = vector.broadcast %cst_5 : f32 to vector<8x128xf32>
    %8 = arith.mulf %7, %4 : vector<8x128xf32>
    %9 = arith.maximumf %6, %8 : vector<8x128xf32>
    %10 = arith.addf %1, %9 : vector<8x128xf32>
    %c1 = arith.constant 1 : index
    %c0_6 = arith.constant 0 : index
    %c0_7 = arith.constant 0 : index
    %11 = vector.load %arg1[%c1, %c0_6, %c0_7] : memref<3x8x128xf32, #tpu.memory_space<vmem>>, vector<1x8x128xf32>
    %12 = vector.shape_cast %11 : vector<1x8x128xf32> to vector<8x128xf32>
    %13 = arith.subf %0, %12 : vector<8x128xf32>
    %cst_8 = arith.constant 5.000000e-01 : f32
    %14 = vector.broadcast %cst_8 : f32 to vector<8x128xf32>
    %15 = arith.mulf %14, %13 : vector<8x128xf32>
    %cst_9 = arith.constant -5.000000e-01 : f32
    %16 = vector.broadcast %cst_9 : f32 to vector<8x128xf32>
    %17 = arith.mulf %16, %13 : vector<8x128xf32>
    %18 = arith.maximumf %15, %17 : vector<8x128xf32>
    %19 = arith.addf %10, %18 : vector<8x128xf32>
    %c2 = arith.constant 2 : index
    %c0_10 = arith.constant 0 : index
    %c0_11 = arith.constant 0 : index
    %20 = vector.load %arg1[%c2, %c0_10, %c0_11] : memref<3x8x128xf32, #tpu.memory_space<vmem>>, vector<1x8x128xf32>
    %21 = vector.shape_cast %20 : vector<1x8x128xf32> to vector<8x128xf32>
    %22 = arith.subf %0, %21 : vector<8x128xf32>
    %cst_12 = arith.constant 0.899999976 : f32
    %23 = vector.broadcast %cst_12 : f32 to vector<8x128xf32>
    %24 = arith.mulf %23, %22 : vector<8x128xf32>
    %cst_13 = arith.constant -1.000000e-01 : f32
    %25 = vector.broadcast %cst_13 : f32 to vector<8x128xf32>
    %26 = arith.mulf %25, %22 : vector<8x128xf32>
    %27 = arith.maximumf %24, %26 : vector<8x128xf32>
    %28 = arith.addf %19, %27 : vector<8x128xf32>
    %29 = vector.shape_cast %28 : vector<8x128xf32> to vector<1x8x128xf32>
    %cst_14 = arith.constant dense<0.000000e+00> : vector<8x128xf32>
    %30 = vector.multi_reduction <add>, %29, %cst_14 [0] : vector<1x8x128xf32> to vector<8x128xf32>
    %31 = vector.shape_cast %30 : vector<8x128xf32> to vector<1x8x128xf32>
    %c0_15 = arith.constant 0 : index
    %c0_16 = arith.constant 0 : index
    %c0_17 = arith.constant 0 : index
    %32 = vector.load %arg3[%c0_15, %c0_16, %c0_17] : memref<1x8x128xf32, #tpu.memory_space<vmem>>, vector<1x8x128xf32>
    tpu.vector_store %arg3[%c0_15, %c0_16, %c0_17], %31 {strides = array<i32>} : memref<1x8x128xf32, #tpu.memory_space<vmem>>, vector<1x8x128xf32>,
    return
  }
  func.func @transform_0(%arg0: i32) -> (i32, i32, i32) {
    %c0_i32 = arith.constant 0 : i32
    %c0_i32_0 = arith.constant 0 : i32
    %c0_i32_1 = arith.constant 0 : i32
    return %c0_i32, %arg0, %c0_i32_0 : i32, i32, i32
  }
  func.func @transform_1(%arg0: i32) -> (i32, i32) {
    %c0_i32 = arith.constant 0 : i32
    %c0_i32_0 = arith.constant 0 : i32
    return %arg0, %c0_i32 : i32, i32
  }
  func.func @transform_2(%arg0: i32) -> (i32, i32, i32) {
    %c0_i32 = arith.constant 0 : i32
    %c0_i32_0 = arith.constant 0 : i32
    %c0_i32_1 = arith.constant 0 : i32
    return %arg0, %c0_i32, %c0_i32_0 : i32, i32, i32
  }
}

</mosaic_0001>

<llo_original>
// kernel: cqr_loss.1
$region0: #{cqr_loss.1}
  #allocation0 [shape = 'u32[]', space=smem, size = 0x4, offset = 0x4, fixed_abs, tag = 'smem constant byte address 0x4 - core index']
  #allocation1 [shape = 'u32[72,128]{1,0:T(1,128)}', space=vmem, size = 0x9000, scoped, tag = 'internal scratch']
  %s0 = inlined_call_operand.vmem [shape: f32[3,8,128], index: 0, kind: input, shape index: {}]
  %s1 = inlined_call_operand.vmem [shape: f32[8,128], index: 1, kind: input, shape index: {}]
  %s2 = inlined_call_operand.vmem [shape: f32[1,8,128], index: 2, kind: output, shape index: {}]
  %s3 = sld [smem:[#allocation0]]
  $region18: #{cqr_loss.1} parent=0
    _
  %s5 = ssub.s32 1, %s3
  %s6 = scalar_select 0, %s5, %s3
  // Predicated region
  $region2: #{cqr_loss.1} parent=0 // pred_check
    _
  $region3: #{cqr_loss.1} parent=0 // pred_check_branch
    %8 = sbr.rel (0) target = $region5
  $region4: #{cqr_loss.1} parent=0 // pred_region
    _
  $region5: #{cqr_loss.1} parent=0 // pred_fallthru
    _
  // Predicated region
  $region6: #{cqr_loss.1} parent=0 // pred_check
    _
  $region7: #{cqr_loss.1} parent=0 // pred_check_branch
    %10 = sbr.rel (0) target = $region9
  $region8: #{cqr_loss.1} parent=0 // pred_region
    _
  $region9: #{cqr_loss.1} parent=0 // pred_fallthru
    _
  %v11 = vld [vmem:[%s1] sm:$0xff]
  %v12 = vld [vmem:[%s0] sm:$0xff]
  %v13 = vsub.f32 %v11, %v12
  %v14 = vmul.f32 %v13, 0.1
  %v15 = vmul.f32 %v13, -0.9
  %v16 = vmax.f32 %v14, %v15
  %v17 = vadd.f32 %v16, 0.0
  %s18 = scalar_lea.vmem %s0, 8
  %v19 = vld [vmem:[%s18] sm:$0xff]
  %v20 = vsub.f32 %v11, %v19
  %v21 = vmul.f32 %v20, 0.5
  %v22 = vmul.f32 %v20, -0.5
  %v23 = vmax.f32 %v21, %v22
  %v24 = vadd.f32 %v17, %v23
  %s25 = scalar_lea.vmem %s0, 16
  %v26 = vld [vmem:[%s25] sm:$0xff]
  %v27 = vsub.f32 %v11, %v26
  %v28 = vmul.f32 %v27, 0.9
  %v29 = vmul.f32 %v27, -0.1
  %v30 = vmax.f32 %v28, %v29
  %v31 = vadd.f32 %v24, %v30
  %v32 = vadd.f32 %v31, 0.0
  %33 = vst [vmem:[%s2] sm:$0xff] %v32
  // Predicated region
  $region10: #{cqr_loss.1} parent=0 // pred_check
    _
  $region11: #{cqr_loss.1} parent=0 // pred_check_branch
    %35 = sbr.rel (0) target = $region13
  $region12: #{cqr_loss.1} parent=0 // pred_region
    _
  $region13: #{cqr_loss.1} parent=0 // pred_fallthru
    _
  // Predicated region
  $region14: #{cqr_loss.1} parent=0 // pred_check
    _
  $region15: #{cqr_loss.1} parent=0 // pred_check_branch
    %37 = sbr.rel (0) target = $region17
  $region16: #{cqr_loss.1} parent=0 // pred_region
    _
  $region17: #{cqr_loss.1} parent=0 // pred_fallthru
    _

</llo_original>
